<compile_context>
chip_gen: v7x
topology: tpu7x:2x2x1
jax: 0.10.0
libtpu: 0.0.40
codegen_flags: <defaults>
</compile_context>

<pallas_src>
import math
import functools
import numpy as np

import jax
import jax.numpy as jnp
from jax.experimental import pallas as pl
from jax.experimental.pallas import tpu as pltpu


# ----------------------------------------------------------------------------- glue helpers

def _round_up(x, m):
    return -(-x // m) * m


def _interp_matrix(out_size, in_size, align_corners=False):
    """1-D bilinear interpolation matrix, shape (out_size, in_size)."""
    M = np.zeros((out_size, in_size), np.float32)
    if in_size == 1:
        M[:, 0] = 1.0
        return M
    for i in range(out_size):
        if align_corners:
            src = i * (in_size - 1) / (out_size - 1) if out_size > 1 else 0.0
        else:
            src = max((i + 0.5) * in_size / out_size - 0.5, 0.0)
        x0 = min(int(math.floor(src)), in_size - 1)
        x1 = min(x0 + 1, in_size - 1)
        lam = src - x0
        M[i, x0] += 1.0 - lam
        M[i, x1] += lam
    return M


def _pool_matrix(H, W, sizes):
    """(K, H*W) matrix implementing all AdaptiveAvgPool2d stages in one matmul."""
    K = sum(s * s for s in sizes)
    P = np.zeros((K, H * W), np.float32)
    k = 0
    for s in sizes:
        for i in range(s):
            h0 = (i * H) // s
            h1 = -((-(i + 1) * H) // s)
            for j in range(s):
                w0 = (j * W) // s
                w1 = -((-(j + 1) * W) // s)
                inv_area = 1.0 / ((h1 - h0) * (w1 - w0))
                for h in range(h0, h1):
                    P[k, h * W + w0:h * W + w1] = inv_area
                k += 1
    return P


def _adaptive_avg_pool_nhwc(x, size):
    """PyTorch AdaptiveAvgPool2d semantics (reference path). x: (N,H,W,C)."""
    N, H, W, C = x.shape
    rows = []
    for i in range(size):
        h0 = (i * H) // size
        h1 = -((-(i + 1) * H) // size)
        cols = []
        for j in range(size):
            w0 = (j * W) // size
            w1 = -((-(j + 1) * W) // size)
            cols.append(jnp.mean(x[:, h0:h1, w0:w1, :], axis=(1, 2)))
        rows.append(jnp.stack(cols, axis=1))
    return jnp.stack(rows, axis=1)


def _vmem_limit_bytes():
    """Per-generation VMEM limit: ~100 MiB on 128-MiB parts (v5e/v6e), 48 MiB on v7x (64 MiB/TC)."""
    cap = 64 * 1024 * 1024
    try:
        info_fn = getattr(pltpu, "get_tpu_info", None)
        if info_fn is not None:
            cap = int(getattr(info_fn(), "vmem_capacity_bytes", cap))
    except Exception:
        pass
    return 100 * 1024 * 1024 if cap >= 100 * 1024 * 1024 else 48 * 1024 * 1024


def _choose_tile_hw(HW_pad, C, F_pad, K_pad, in_bytes, out_bytes, vmem_limit, cap=None):
    """Largest multiple-of-128 divisor of HW_pad whose double-buffered footprint fits VMEM."""
    budget = int(vmem_limit * 0.75)
    fixed = 2 * (F_pad * K_pad * 4 + F_pad * C * 4 + F_pad * 4)        # S^T, Wf^T, bias
    per_col = 2 * (C * in_bytes + F_pad * out_bytes + K_pad * 4)       # feats, out, M^T per column
    max_t = max((budget - fixed) // max(per_col, 1), 128)
    if cap is not None:
        max_t = max(min(max_t, cap), 128)
    n128 = HW_pad // 128
    best = 128
    for d in range(1, n128 + 1):
        if n128 % d == 0 and d * 128 <= max_t:
            best = d * 128
    return best


# ----------------------------------------------------------------------------- Pallas kernel

def _psp_kernel(f_ref, m_ref, s_ref, wf_ref, b_ref, o_ref, *, compute_dtype):
    # f_ref : (1, C, T_HW)       feats tile, input dtype (cast to compute_dtype in-kernel)
    # m_ref : (K_pad, T_HW)      transposed bilinear-upsample matrix (f32, batch-invariant)
    # s_ref : (1, F_pad, K_pad)  folded pyramid term (f32, per image)
    # wf_ref: (F_pad, C)         bottleneck slice acting on raw feats (compute_dtype)
    # b_ref : (F_pad, 1)         bottleneck bias (f32)
    # o_ref : (1, F_pad, T_HW)   output tile
    f = f_ref[0]
    if f.dtype != compute_dtype:
        f = f.astype(compute_dtype)
    y = jnp.dot(wf_ref[...], f, preferred_element_type=jnp.float32)
    y = y + jnp.dot(s_ref[0], m_ref[...], preferred_element_type=jnp.float32)
    y = y + b_ref[...]
    o_ref[0] = jnp.maximum(y, 0.0).astype(o_ref.dtype)


# ----------------------------------------------------------------------------- wrapper

def psp_module_forward(feats_nchw, params, sizes=(1, 2, 3, 6), *,
                       compute_dtype=jnp.bfloat16, out_dtype=jnp.float32,
                       tile_hw=None, align_corners=False):
    N, C, H, W = feats_nchw.shape
    HW = H * W
    n_stage = len(sizes)
    F_out = params["bottleneck_w"].shape[0]

    K = sum(s * s for s in sizes)          # 50 for (1,2,3,6)
    K_pad = _round_up(K, 8)                # sublane granularity only
    F_pad = _round_up(F_out, 8)            # F is the sublane dim in channel-major layout
    HW_pad = _round_up(HW, 128)            # lane dim tiles by 128

    in_bytes = jnp.dtype(feats_nchw.dtype).itemsize
    out_bytes = jnp.dtype(out_dtype).itemsize
    vmem_limit = _vmem_limit_bytes()
    T_HW = _choose_tile_hw(HW_pad, C, F_pad, K_pad, in_bytes, out_bytes, vmem_limit, cap=tile_hw)
    n_hw_tiles = HW_pad // T_HW

    feats_flat = feats_nchw.reshape(N, C, HW)                    # NCHW -> (N,C,HW): free reshape

    # ---- folded pyramid term S^T = (Wb_s @ W_s) @ pooled, computed once in the wrapper ----
    P_cat = jnp.asarray(_pool_matrix(H, W, sizes))               # (K, HW)
    pooled = jnp.einsum("nch,kh->nck", feats_flat.astype(jnp.float32), P_cat)   # (N, C, K)

    wb = params["bottleneck_w"].astype(jnp.float32).reshape(F_out, n_stage + 1, C)
    wb = jnp.transpose(wb, (1, 0, 2))                            # (n_stage+1, F_out, C)

    s_parts, k0 = [], 0
    for idx, s in enumerate(sizes):
        A = wb[idx] @ params["stage_w"][idx].astype(jnp.float32)          # (F_out, C)
        s_parts.append(jnp.einsum("fc,nck->nfk", A, pooled[:, :, k0:k0 + s * s]))
        k0 += s * s
    s_cat_T = jnp.concatenate(s_parts, axis=2)                   # (N, F_out, K)
    s_cat_T = jnp.pad(s_cat_T, ((0, 0), (0, F_pad - F_out), (0, K_pad - K)))

    # ---- transposed bilinear upsample matrix, all stages concatenated (batch-invariant) ----
    m_parts = []
    for s in sizes:
        wh = _interp_matrix(H, s, align_corners)
        ww = _interp_matrix(W, s, align_corners)
        m_parts.append(np.einsum("ia,jb->abij", wh, ww).reshape(s * s, HW))
    m_cat_T = np.pad(np.concatenate(m_parts, axis=0),
                     ((0, K_pad - K), (0, HW_pad - HW)))
    m_cat_T = jnp.asarray(m_cat_T, jnp.float32)                  # (K_pad, HW_pad)

    wf_T = jnp.pad(wb[n_stage], ((0, F_pad - F_out), (0, 0))).astype(compute_dtype)   # (F_pad, C)
    bias = jnp.pad(params["bottleneck_b"].astype(jnp.float32),
                   (0, F_pad - F_out)).reshape(F_pad, 1)

    # feats stay in their input dtype (cast in-kernel); pad only if HW is not a 128 multiple.
    feats_in = feats_flat if HW_pad == HW else jnp.pad(
        feats_flat, ((0, 0), (0, 0), (0, HW_pad - HW)))

    kernel = functools.partial(_psp_kernel, compute_dtype=compute_dtype)

    out = pl.pallas_call(
        kernel,
        out_shape=jax.ShapeDtypeStruct((N, F_pad, HW_pad), out_dtype),
        grid_spec=pltpu.PrefetchScalarGridSpec(
            num_scalar_prefetch=0,
            grid=(n_hw_tiles, N),       # t outer, n inner: M^T tile / Wf^T resident over batch
            in_specs=[
                pl.BlockSpec((1, C, T_HW), lambda t, n: (n, 0, t)),        # feats tile
                pl.BlockSpec((K_pad, T_HW), lambda t, n: (0, t)),          # M^T tile (batch-invariant)
                pl.BlockSpec((1, F_pad, K_pad), lambda t, n: (n, 0, 0)),   # folded S^T (per image)
                pl.BlockSpec((F_pad, C), lambda t, n: (0, 0)),             # Wf^T
                pl.BlockSpec((F_pad, 1), lambda t, n: (0, 0)),             # bias
            ],
            out_specs=pl.BlockSpec((1, F_pad, T_HW), lambda t, n: (n, 0, t)),
        ),
        compiler_params=pltpu.CompilerParams(
            dimension_semantics=("parallel", "parallel"),   # megacore sharding
            vmem_limit_bytes=vmem_limit,
        ),
    )(feats_in, m_cat_T, s_cat_T, wf_T, bias)

    out = out[:, :F_out, :HW]                 # no-op slice when nothing was padded
    return out.reshape(N, F_out, H, W)        # already NCHW — no transpose


# ----------------------------------------------------------------------------- reference & params

def psp_reference(feats_nchw, params, sizes=(1, 2, 3, 6), align_corners=False):
    """Pure-JAX reference mirroring the PyTorch forward (for correctness check)."""
    N, C, H, W = feats_nchw.shape
    x = jnp.transpose(feats_nchw, (0, 2, 3, 1)).astype(jnp.float32)
    priors = []
    for s, w in zip(sizes, params["stage_w"]):
        p = _adaptive_avg_pool_nhwc(x, s)                               # (N,s,s,C)
        p = jnp.einsum("nabc,oc->nabo", p, w)                           # 1x1 conv, no bias
        wh = jnp.asarray(_interp_matrix(H, s, align_corners))
        ww = jnp.asarray(_interp_matrix(W, s, align_corners))
        priors.append(jnp.einsum("ia,jb,nabo->nijo", wh, ww, p))        # bilinear upsample
    priors.append(x)
    cat = jnp.concatenate(priors, axis=-1)                              # (N,H,W,(len+1)*C)
    y = jnp.einsum("nijc,fc->nijf", cat, params["bottleneck_w"]) + params["bottleneck_b"]
    y = jnp.maximum(y, 0.0)
    return jnp.transpose(y, (0, 3, 1, 2))


def init_params(key, features, out_features, sizes):
    keys = jax.random.split(key, len(sizes) + 2)
    stage_w = [0.1 * jax.random.normal(keys[i], (features, features), jnp.float32)
               for i in range(len(sizes))]
    bw = 0.1 * jax.random.normal(keys[-2], (out_features, features * (len(sizes) + 1)), jnp.float32)
    bb = 0.1 * jax.random.normal(keys[-1], (out_features,), jnp.float32)
    return {"stage_w": stage_w, "bottleneck_w": bw, "bottleneck_b": bb}


# ----------------------------------------------------------------------------- main

if __name__ == "__main__":
    key = jax.random.PRNGKey(0)
    k_x, k_p = jax.random.split(key)

    N, C, H, W = 2, 4, 16, 16
    F_out = 32
    sizes = (1, 2, 3, 6)

    x = jax.random.normal(k_x, (N, C, H, W), jnp.float32)
    params = init_params(k_p, C, F_out, sizes)

    ref = jax.block_until_ready(psp_reference(x, params, sizes))

    # f32 MXU feed: tight check
    out_f32 = jax.block_until_ready(
        psp_module_forward(x, params, sizes, compute_dtype=jnp.float32))
    assert out_f32.shape == (N, F_out, H, W), out_f32.shape
    np.testing.assert_allclose(np.asarray(out_f32), np.asarray(ref), rtol=1e-3, atol=1e-3)

    # default bf16 MXU feed (f32 accumulation, f32 interp/stage term): loose check
    out_bf16 = jax.block_until_ready(psp_module_forward(x, params, sizes))
    np.testing.assert_allclose(np.asarray(out_bf16), np.asarray(ref), rtol=5e-2, atol=5e-2)

    print("KERNEL_OK")
</pallas_src>

<mosaic_0001>
module attributes {stable_mosaic.version = 11 : i64} {
  func.func @_psp_kernel(%arg0: i32, %arg1: i32, %arg2: memref<1x4x256xf32, #tpu.memory_space<vmem>>, %arg3: memref<56x256xf32, #tpu.memory_space<vmem>>, %arg4: memref<1x32x56xf32, #tpu.memory_space<vmem>>, %arg5: memref<32x4xf32, #tpu.memory_space<vmem>>, %arg6: memref<32x1xf32, #tpu.memory_space<vmem>>, %arg7: memref<1x32x256xf32, #tpu.memory_space<vmem>>) attributes {dimension_semantics = [#tpu.dimension_semantics<parallel>, #tpu.dimension_semantics<parallel>], iteration_bounds = array<i64: 1, 2>, scalar_prefetch = 0 : i64, scratch_operands = 0 : i64, tpu.core_type = #tpu.core_type<tc>, window_params = [{transform_indices = @transform_0, window_bounds = array<i64: 1, 4, 256>}, {transform_indices = @transform_1, window_bounds = array<i64: 56, 256>}, {transform_indices = @transform_2, window_bounds = array<i64: 1, 32, 56>}, {pipeline_mode = #tpu.pipeline_mode<synchronous>, transform_indices = @transform_3, window_bounds = array<i64: 32, 4>}, {pipeline_mode = #tpu.pipeline_mode<synchronous>, transform_indices = @transform_4, window_bounds = array<i64: 32, 1>}, {transform_indices = @transform_5, window_bounds = array<i64: 1, 32, 256>}]} {
    %c0 = arith.constant 0 : index
    %c0_0 = arith.constant 0 : index
    %c0_1 = arith.constant 0 : index
    %0 = vector.load %arg2[%c0, %c0_0, %c0_1] : memref<1x4x256xf32, #tpu.memory_space<vmem>>, vector<1x4x256xf32>
    %1 = vector.shape_cast %0 : vector<1x4x256xf32> to vector<4x256xf32>
    %c0_2 = arith.constant 0 : index
    %c0_3 = arith.constant 0 : index
    %2 = vector.load %arg5[%c0_2, %c0_3] : memref<32x4xf32, #tpu.memory_space<vmem>>, vector<32x4xf32>
    %cst = arith.constant dense<0.000000e+00> : vector<32x256xf32>
    %3 = tpu.matmul %2, %1, %cst {dimension_numbers = #tpu.dot_dimension_numbers<[1], [0], [0], [1], [0, 0, 1, 1], [], []>} : vector<32x4xf32>, vector<4x256xf32>, vector<32x256xf32> -> vector<32x256xf32>
    %c0_4 = arith.constant 0 : index
    %c0_5 = arith.constant 0 : index
    %c0_6 = arith.constant 0 : index
    %4 = vector.load %arg4[%c0_4, %c0_5, %c0_6] : memref<1x32x56xf32, #tpu.memory_space<vmem>>, vector<1x32x56xf32>
    %5 = vector.shape_cast %4 : vector<1x32x56xf32> to vector<32x56xf32>
    %c0_7 = arith.constant 0 : index
    %c0_8 = arith.constant 0 : index
    %6 = vector.load %arg3[%c0_7, %c0_8] : memref<56x256xf32, #tpu.memory_space<vmem>>, vector<56x256xf32>
    %cst_9 = arith.constant dense<0.000000e+00> : vector<32x256xf32>
    %7 = tpu.matmul %5, %6, %cst_9 {dimension_numbers = #tpu.dot_dimension_numbers<[1], [0], [0], [1], [0, 0, 1, 1], [], []>} : vector<32x56xf32>, vector<56x256xf32>, vector<32x256xf32> -> vector<32x256xf32>
    %8 = arith.addf %3, %7 : vector<32x256xf32>
    %c0_10 = arith.constant 0 : index
    %c0_11 = arith.constant 0 : index
    %9 = vector.load %arg6[%c0_10, %c0_11] : memref<32x1xf32, #tpu.memory_space<vmem>>, vector<32x1xf32>
    %10 = vector.broadcast %9 : vector<32x1xf32> to vector<32x256xf32>
    %11 = arith.addf %8, %10 : vector<32x256xf32>
    %cst_12 = arith.constant 0.000000e+00 : f32
    %12 = vector.broadcast %cst_12 : f32 to vector<32x256xf32>
    %13 = arith.maximumf %11, %12 : vector<32x256xf32>
    %c0_13 = arith.constant 0 : index
    %c0_14 = arith.constant 0 : index
    %c0_15 = arith.constant 0 : index
    %14 = vector.load %arg7[%c0_13, %c0_14, %c0_15] : memref<1x32x256xf32, #tpu.memory_space<vmem>>, vector<1x32x256xf32>
    %15 = vector.shape_cast %14 : vector<1x32x256xf32> to vector<32x256xf32>
    %16 = vector.shape_cast %13 : vector<32x256xf32> to vector<1x32x256xf32>
    tpu.vector_store %arg7[%c0_13, %c0_14, %c0_15], %16 {strides = array<i32>} : memref<1x32x256xf32, #tpu.memory_space<vmem>>, vector<1x32x256xf32>,
    return
  }
  func.func @transform_0(%arg0: i32, %arg1: i32) -> (i32, i32, i32) {
    %c0_i32 = arith.constant 0 : i32
    %c0_i32_0 = arith.constant 0 : i32
    return %arg1, %c0_i32, %arg0 : i32, i32, i32
  }
  func.func @transform_1(%arg0: i32, %arg1: i32) -> (i32, i32) {
    %c0_i32 = arith.constant 0 : i32
    %c0_i32_0 = arith.constant 0 : i32
    return %c0_i32, %arg0 : i32, i32
  }
  func.func @transform_2(%arg0: i32, %arg1: i32) -> (i32, i32, i32) {
    %c0_i32 = arith.constant 0 : i32
    %c0_i32_0 = arith.constant 0 : i32
    %c0_i32_1 = arith.constant 0 : i32
    return %arg1, %c0_i32, %c0_i32_0 : i32, i32, i32
  }
  func.func @transform_3(%arg0: i32, %arg1: i32) -> (i32, i32) {
    %c0_i32 = arith.constant 0 : i32
    %c0_i32_0 = arith.constant 0 : i32
    %c0_i32_1 = arith.constant 0 : i32
    return %c0_i32, %c0_i32_0 : i32, i32
  }
  func.func @transform_4(%arg0: i32, %arg1: i32) -> (i32, i32) {
    %c0_i32 = arith.constant 0 : i32
    %c0_i32_0 = arith.constant 0 : i32
    %c0_i32_1 = arith.constant 0 : i32
    return %c0_i32, %c0_i32_0 : i32, i32
  }
  func.func @transform_5(%arg0: i32, %arg1: i32) -> (i32, i32, i32) {
    %c0_i32 = arith.constant 0 : i32
    %c0_i32_0 = arith.constant 0 : i32
    return %arg1, %c0_i32, %arg0 : i32, i32, i32
  }
}

</mosaic_0001>

<llo_original>
// kernel: tpu_custom_call.1
$region0: #{tpu_custom_call.1}
  #allocation0 [shape = 'u32[]', space=smem, size = 0x4, offset = 0x4, fixed_abs, tag = 'smem constant byte address 0x4 - core index']
  #allocation1 [shape = 'u32[144,128]{1,0:T(1,128)}', space=vmem, size = 0x12000, scoped, tag = 'internal scratch']
  %s0 = inlined_call_operand.hbm [shape: f32[2,4,256], index: 0, kind: input, shape index: {}]
  %s1 = inlined_call_operand.hbm [shape: f32[56,256], index: 1, kind: input, shape index: {}]
  %s2 = inlined_call_operand.vmem [shape: f32[2,32,56], index: 2, kind: input, shape index: {}]
  %s3 = inlined_call_operand.vmem [shape: f32[32,4], index: 3, kind: input, shape index: {}]
  %s4 = inlined_call_operand.vmem [shape: f32[32,1], index: 4, kind: input, shape index: {}]
  %s5 = inlined_call_operand.hbm [shape: f32[2,32,256], index: 5, kind: output, shape index: {}]
  %s6 = sld [smem:[#allocation0]]
  $region61: #{tpu_custom_call.1} parent=0
    _
  %s8 = ssub.s32 1, %s6
  %s9 = scalar_select 0, %s8, %s6
  $region1: #{tpu_custom_call.1} parent=0
    #allocation2 [shape = 'u8[8192]{0}', space=vmem, size = 0x2000, scoped, tag = 'input window, operand 0']
    #allocation3 [shape = 's32[2]{0}', space=sflag, size = 0x8, scoped, tag = 'scoped memory for tpu_custom_call.1']
    #allocation4 [shape = 's32[2]{0}', space=sflag, size = 0x8, scoped, tag = 'scoped memory for tpu_custom_call.1']
    #allocation5 [shape = 'u8[57344]{0}', space=vmem, size = 0xe000, scoped, tag = 'input window, operand 1, single buffered']
    #allocation6 [shape = 's32[1]{0}', space=sflag, size = 0x4, scoped, tag = 'scoped memory for tpu_custom_call.1']
    #allocation7 [shape = 'u8[65536]{0}', space=vmem, size = 0x10000, scoped, tag = 'output window, operand 0']
    %10 = vsyncpa [#allocation3], 0
    %s11 = scalar_lea.sflag [#allocation3], 1
    %12 = vsyncpa %s11, 0
    %13 = vsyncpa [#allocation6], 0
    %14 = vsyncpa [#allocation4], 0
    %s15 = scalar_lea.sflag [#allocation4], 1
    %16 = vsyncpa %s15, 0
    loop: start=0, step=1, limit=4
    $region2: #{tpu_custom_call.1} parent=1 // loop_pre_header
      _
    $region3: #{tpu_custom_call.1} parent=1 // loop_header
      %s18 = sphi 0, %s22
      %p19 = scmp.ge.s32.totalorder %s18, 4
      %s25 = sphi 0, %s37
      %s26 = sphi 0, %s33
      %s27 = sphi 0, %s25
      %s28 = sphi 0, %s26
      %s29 = sphi 0, %s27
      %s30 = sphi 0, %s28
      %s42 = sphi 0, %s44
      %s45 = sphi 0, %s42
      %s46 = sphi 0, %s45
      %s62 = sphi 0, %s46
      %s68 = sphi 0, %s70
      %s71 = sphi 0, %s68
      %s72 = sphi 0, %s71
      %s88 = sphi 0, %s72
      %s94 = sphi 0, %s96
      %s97 = sphi 0, %s94
      %s98 = sphi 0, %s97
      %s114 = sphi 0, %s98
      %s118 = sphi 0, %s118
      %s120 = sphi 0, %s118
      %s121 = sphi 0, %s120
      %s135 = sphi 0, %s121
      %s139 = sphi 0, %s139
      %s141 = sphi 0, %s139
      %s142 = sphi 0, %s141
      %s156 = sphi 0, %s142
      %s164 = sphi 0, %s166
      %s167 = sphi 0, %s164
      %s168 = sphi 0, %s167
      %s184 = sphi 0, %s168
    $region4: #{tpu_custom_call.1} parent=1 // loop_header_branch
      %21 = sbr.rel (%p19) target = $region8
    $region5: #{tpu_custom_call.1} parent=1 // loop_body
      %s23 = ssub.s32 %s18, 1
      %s24 = ssub.s32 %s18, 2
      %s31 = sadd.s32 1, %s26
      %p32 = scmp.ge.s32.totalorder %s31, 2
      %s33 = scalar_select %p32, 0, %s31
      %s34 = sadd.s32 1, %s25
      %s35 = scalar_select %p32, %s34, %s25
      %p36 = scmp.ge.s32.totalorder %s35, 1
      %s37 = scalar_select %p36, 0, %s35
      %s38 = ssub.s32 %s26, %s33
      %s39 = ssub.s32 %s25, %s37
      %s40 = sor.u32 %s38, %s39
      %p41 = scmp.eq.s32.totalorder %s40, 0
      %s43 = sadd.s32 %s42, 1
      %s44 = scalar_select %p41, %s42, %s43
      %p47 = pneg %p41
      %p48 = scmp.eq.s32.totalorder %s18, 1
      %p49 = por %p47, %p48
      %p50 = scmp.ne.s32.totalorder %s42, %s45
      %p51 = scmp.eq.s32.totalorder %s18, 0
      %p52 = por %p50, %p51
      %p53 = scmp.ne.s32.totalorder %s42, %s45
      %p54 = scmp.eq.s32.totalorder %s23, 1
      %p55 = por %p53, %p54
      %p56 = scmp.ne.s32.totalorder %s45, %s46
      %p57 = scmp.eq.s32.totalorder %s23, 0
      %p58 = por %p56, %p57
      %p59 = scmp.ne.s32.totalorder %s45, %s46
      %p60 = scmp.eq.s32.totalorder %s24, 1
      %p61 = por %p59, %p60
      %p63 = scmp.ne.s32.totalorder %s46, %s62
      %p64 = scmp.eq.s32.totalorder %s24, 0
      %p65 = por %p63, %p64
      %s66 = ssub.s32 %s25, %s37
      %p67 = scmp.eq.s32.totalorder %s66, 0
      %s69 = sadd.s32 %s68, 1
      %s70 = scalar_select %p67, %s68, %s69
      %p73 = pneg %p67
      %p74 = scmp.eq.s32.totalorder %s18, 1
      %p75 = por %p73, %p74
      %p76 = scmp.ne.s32.totalorder %s68, %s71
      %p77 = scmp.eq.s32.totalorder %s18, 0
      %p78 = por %p76, %p77
      %p79 = scmp.ne.s32.totalorder %s68, %s71
      %p80 = scmp.eq.s32.totalorder %s23, 1
      %p81 = por %p79, %p80
      %p82 = scmp.ne.s32.totalorder %s71, %s72
      %p83 = scmp.eq.s32.totalorder %s23, 0
      %p84 = por %p82, %p83
      %p85 = scmp.ne.s32.totalorder %s71, %s72
      %p86 = scmp.eq.s32.totalorder %s24, 1
      %p87 = por %p85, %p86
      %p89 = scmp.ne.s32.totalorder %s72, %s88
      %p90 = scmp.eq.s32.totalorder %s24, 0
      %p91 = por %p89, %p90
      %s92 = ssub.s32 %s26, %s33
      %p93 = scmp.eq.s32.totalorder %s92, 0
      %s95 = sadd.s32 %s94, 1
      %s96 = scalar_select %p93, %s94, %s95
      %p99 = pneg %p93
      %p100 = scmp.eq.s32.totalorder %s18, 1
      %p101 = por %p99, %p100
      %p102 = scmp.ne.s32.totalorder %s94, %s97
      %p103 = scmp.eq.s32.totalorder %s18, 0
      %p104 = por %p102, %p103
      %p105 = scmp.ne.s32.totalorder %s94, %s97
      %p106 = scmp.eq.s32.totalorder %s23, 1
      %p107 = por %p105, %p106
      %p108 = scmp.ne.s32.totalorder %s97, %s98
      %p109 = scmp.eq.s32.totalorder %s23, 0
      %p110 = por %p108, %p109
      %p111 = scmp.ne.s32.totalorder %s97, %s98
      %p112 = scmp.eq.s32.totalorder %s24, 1
      %p113 = por %p111, %p112
      %p115 = scmp.ne.s32.totalorder %s98, %s114
      %p116 = scmp.eq.s32.totalorder %s24, 0
      %p117 = por %p115, %p116
      %s119 = sadd.s32 %s118, 1
      %p122 = scmp.eq.s32.totalorder %s18, 1
      %p123 = scmp.ne.s32.totalorder %s118, %s120
      %p124 = scmp.eq.s32.totalorder %s18, 0
      %p125 = por %p123, %p124
      %p126 = scmp.ne.s32.totalorder %s118, %s120
      %p127 = scmp.eq.s32.totalorder %s23, 1
      %p128 = por %p126, %p127
      %p129 = scmp.ne.s32.totalorder %s120, %s121
      %p130 = scmp.eq.s32.totalorder %s23, 0
      %p131 = por %p129, %p130
      %p132 = scmp.ne.s32.totalorder %s120, %s121
      %p133 = scmp.eq.s32.totalorder %s24, 1
      %p134 = por %p132, %p133
      %p136 = scmp.ne.s32.totalorder %s121, %s135
      %p137 = scmp.eq.s32.totalorder %s24, 0
      %p138 = por %p136, %p137
      %s140 = sadd.s32 %s139, 1
      %p143 = scmp.eq.s32.totalorder %s18, 1
      %p144 = scmp.ne.s32.totalorder %s139, %s141
      %p145 = scmp.eq.s32.totalorder %s18, 0
      %p146 = por %p144, %p145
      %p147 = scmp.ne.s32.totalorder %s139, %s141
      %p148 = scmp.eq.s32.totalorder %s23, 1
      %p149 = por %p147, %p148
      %p150 = scmp.ne.s32.totalorder %s141, %s142
      %p151 = scmp.eq.s32.totalorder %s23, 0
      %p152 = por %p150, %p151
      %p153 = scmp.ne.s32.totalorder %s141, %s142
      %p154 = scmp.eq.s32.totalorder %s24, 1
      %p155 = por %p153, %p154
      %p157 = scmp.ne.s32.totalorder %s142, %s156
      %p158 = scmp.eq.s32.totalorder %s24, 0
      %p159 = por %p157, %p158
      %s160 = ssub.s32 %s26, %s33
      %s161 = ssub.s32 %s25, %s37
      %s162 = sor.u32 %s160, %s161
      %p163 = scmp.eq.s32.totalorder %s162, 0
      %s165 = sadd.s32 %s164, 1
      %s166 = scalar_select %p163, %s164, %s165
      %p169 = pneg %p163
      %p170 = scmp.eq.s32.totalorder %s18, 1
      %p171 = por %p169, %p170
      %p172 = scmp.ne.s32.totalorder %s164, %s167
      %p173 = scmp.eq.s32.totalorder %s18, 0
      %p174 = por %p172, %p173
      %p175 = scmp.ne.s32.totalorder %s164, %s167
      %p176 = scmp.eq.s32.totalorder %s23, 1
      %p177 = por %p175, %p176
      %p178 = scmp.ne.s32.totalorder %s167, %s168
      %p179 = scmp.eq.s32.totalorder %s23, 0
      %p180 = por %p178, %p179
      %p181 = scmp.ne.s32.totalorder %s167, %s168
      %p182 = scmp.eq.s32.totalorder %s24, 1
      %p183 = por %p181, %p182
      %p185 = scmp.ne.s32.totalorder %s168, %s184
      %p186 = scmp.eq.s32.totalorder %s24, 0
      %p187 = por %p185, %p186
      %p188 = scmp.le.s32.totalorder 1, %s18
      %p189 = scmp.lt.s32.totalorder %s18, 3
      %p190 = pnand %p188, %p189
      %p191 = pneg %p190
      // Predicated region
      $region9: #{tpu_custom_call.1} parent=5 // pred_check
        _
      $region10: #{tpu_custom_call.1} parent=5 // pred_check_branch
        %193 = sbr.rel (%p190) target = $region12
      $region11: #{tpu_custom_call.1} parent=5 // pred_region
        %s194 = ssub.s32 %s18, 1
        // Predicated region
        $region13: #{tpu_custom_call.1} parent=11 // pred_check
          %p195 = pneg %p84
        $region14: #{tpu_custom_call.1} parent=11 // pred_check_branch
          %197 = sbr.rel (%p195) target = $region16
        $region15: #{tpu_custom_call.1} parent=11 // pred_region
          %s198 = smul.u32 2, %s27
          %s200 = ssub.s32 1792, 1792
          %201 = vsyncadd [#allocation6], %s200
          %s202 = smul.addr %s198, 128
          %s203 = scalar_lea.hbm %s1, %s202
          %s204 = sshll.u32 [#allocation5], 4
          %s205 = int_to_ptr.vmem [resolvable:$true] %s204
          %210 = dma.hbm_to_vmem [thread:$0]  %s203, 1792, %s205, [#allocation6], 256, 256, 16
        $region16: #{tpu_custom_call.1} parent=11 // pred_fallthru
          _
        // Predicated region
        $region17: #{tpu_custom_call.1} parent=11 // pred_check
          %p211 = pneg %p131
        $region18: #{tpu_custom_call.1} parent=11 // pred_check_branch
          %213 = sbr.rel (%p211) target = $region20
        $region19: #{tpu_custom_call.1} parent=11 // pred_region
          _
        $region20: #{tpu_custom_call.1} parent=11 // pred_fallthru
          _
        // Predicated region
        $region21: #{tpu_custom_call.1} parent=11 // pred_check
          %p214 = pneg %p152
        $region22: #{tpu_custom_call.1} parent=11 // pred_check_branch
          %216 = sbr.rel (%p214) target = $region24
        $region23: #{tpu_custom_call.1} parent=11 // pred_region
          _
        $region24: #{tpu_custom_call.1} parent=11 // pred_fallthru
          _
      $region12: #{tpu_custom_call.1} parent=5 // pred_fallthru
        _
      %p217 = scmp.lt.s32.totalorder %s18, 2
      // Predicated region
      $region25: #{tpu_custom_call.1} parent=5 // pred_check
        %p218 = pneg %p217
      $region26: #{tpu_custom_call.1} parent=5 // pred_check_branch
        %220 = sbr.rel (%p218) target = $region28
      $region27: #{tpu_custom_call.1} parent=5 // pred_region
        // Predicated region
        $region29: #{tpu_custom_call.1} parent=27 // pred_check
          %p221 = pneg %p52
        $region30: #{tpu_custom_call.1} parent=27 // pred_check_branch
          %223 = sbr.rel (%p221) target = $region32
        $region31: #{tpu_custom_call.1} parent=27 // pred_region
          %s224 = sand.u32 %s42, 1
          %s225 = scalar_lea.sflag [#allocation3], %s224
          %s226 = sand.u32 %s42, 1
          %s227 = smul.addr %s226, 8
          %s228 = scalar_lea.vmem [#allocation2], %s227
          %s229 = smul.u32 2, %s25
          %s231 = ssub.s32 128, 128
          %232 = vsyncadd %s225, %s231
          %s233 = smul.addr %s26, 2
          %s234 = sadd.s32 %s229, %s233
          %s235 = smul.addr %s234, 64
          %s236 = scalar_lea.hbm %s0, %s235
          %s238 = sshll.u32 %s228, 4
          %s239 = int_to_ptr.vmem [resolvable:$true] %s238
          %241 = dma.hbm_to_vmem [thread:$0]  %s236, 128, %s239, %s225
        $region32: #{tpu_custom_call.1} parent=27 // pred_fallthru
          _
        // Predicated region
        $region33: #{tpu_custom_call.1} parent=27 // pred_check
          %p242 = pneg %p104
        $region34: #{tpu_custom_call.1} parent=27 // pred_check_branch
          %244 = sbr.rel (%p242) target = $region36
        $region35: #{tpu_custom_call.1} parent=27 // pred_region
          %p245 = scmp.lt.s32.totalorder %s26, 1
          %s246 = scalar_select %p245, %s26, 1
          %s247 = smul.addr %s246, 4
          %s248 = smul.addr %s247, 8
          %s249 = scalar_lea.vmem %s2, %s248
        $region36: #{tpu_custom_call.1} parent=27 // pred_fallthru
          _
      $region28: #{tpu_custom_call.1} parent=5 // pred_fallthru
        _
      %p250 = scmp.le.s32.totalorder 1, %s18
      %p251 = scmp.lt.s32.totalorder %s18, 3
      %p252 = pnand %p250, %p251
      %p253 = pneg %p252
      // Predicated region
      $region37: #{tpu_custom_call.1} parent=5 // pred_check
        _
      $region38: #{tpu_custom_call.1} parent=5 // pred_check_branch
        %255 = sbr.rel (%p252) target = $region40
      $region39: #{tpu_custom_call.1} parent=5 // pred_region
        %s256 = ssub.s32 %s18, 1
        %s257 = sand.u32 %s45, 1
        %s258 = scalar_lea.sflag [#allocation3], %s257
        %s259 = sand.u32 %s45, 1
        %s260 = smul.addr %s259, 8
        %s261 = scalar_lea.vmem [#allocation2], %s260
        // Predicated region
        $region41: #{tpu_custom_call.1} parent=39 // pred_check
          %p262 = pneg %p58
        $region42: #{tpu_custom_call.1} parent=39 // pred_check_branch
          %264 = sbr.rel (%p262) target = $region44
        $region43: #{tpu_custom_call.1} parent=39 // pred_region
          %265 = dma.done %s258, 128
        $region44: #{tpu_custom_call.1} parent=39 // pred_fallthru
          _
        // Predicated region
        $region45: #{tpu_custom_call.1} parent=39 // pred_check
          %p266 = pneg %p84
        $region46: #{tpu_custom_call.1} parent=39 // pred_check_branch
          %268 = sbr.rel (%p266) target = $region48
        $region47: #{tpu_custom_call.1} parent=39 // pred_region
          %269 = dma.done [#allocation6], 1792
        $region48: #{tpu_custom_call.1} parent=39 // pred_fallthru
          _
        %s270 = sand.u32 %s45, 1
        %s271 = scalar_lea.sflag [#allocation3], %s270
        %s272 = sand.u32 %s45, 1
        %s273 = smul.addr %s272, 8
        %s274 = scalar_lea.vmem [#allocation2], %s273
        %p275 = pneg %p58
        %p276 = pneg %p55
        %p277 = pneg %p84
        %p278 = pneg %p81
        %p279 = scmp.lt.s32.totalorder %s28, 1
        %s280 = scalar_select %p279, %s28, 1
        %s281 = smul.addr %s280, 4
        %s282 = smul.addr %s281, 8
        %s283 = scalar_lea.vmem %s2, %s282
        %p284 = pneg %p110
        %p285 = pneg %p107
        %p286 = pneg %p131
        %p287 = pneg %p128
        %p288 = pneg %p152
        %p289 = pneg %p149
        %p290 = pneg %p180
        %p291 = pneg %p177
        %s292 = sand.u32 %s167, 1
        %s293 = scalar_lea.sflag [#allocation4], %s292
        %s294 = sand.u32 %s167, 1
        %s295 = smul.addr %s294, 64
        %s296 = scalar_lea.vmem [#allocation7], %s295
        %s297 = smul.u32 2, %s27
        %s298 = smul.u32 2, %s27
        %p299 = scmp.lt.s32.totalorder %s28, 1
        %s300 = scalar_select %p299, %s28, 1
        %s301 = smul.addr %s300, 4
        %s302 = smul.addr %s301, 8
        %s303 = scalar_lea.vmem %s2, %s302
        %s304 = smul.u32 2, %s27
        %v305 = vld [vmem:[%s261] sm:$0xff]
        %v306 = vld [vmem:[%s3] sm:$0xff]
        %v307 = vld [vmem:[%s3 + $0x8] sm:$0xff]
        %v308 = vld [vmem:[%s3 + $0x10] sm:$0xff]
        %v309 = vld [vmem:[%s3 + $0x18] sm:$0xff]
        %v310 = vld [vmem:[%s303] sm:$0xff]
        %v311 = vld [vmem:[%s303 + $0x8] sm:$0xff]
        %v312 = vld [vmem:[%s303 + $0x10] sm:$0xff]
        %v313 = vld [vmem:[%s303 + $0x18] sm:$0xff]
        %v314 = vld [vmem:[#allocation5] sm:$0xff]
        %v315 = vld [vmem:[#allocation5 + $0x8] sm:$0xff]
        %v316 = vld [vmem:[#allocation5 + $0x10] sm:$0xff]
        %v317 = vld [vmem:[#allocation5 + $0x18] sm:$0xff]
        %v318 = vld [vmem:[#allocation5 + $0x20] sm:$0xff]
        %v319 = vld [vmem:[#allocation5 + $0x28] sm:$0xff]
        %v320 = vld [vmem:[#allocation5 + $0x30] sm:$0xff]
        %v321 = vld [vmem:[#allocation5 + $0x38] sm:$0xff]
        %v322 = vld [vmem:[#allocation5 + $0x40] sm:$0xff]
        %v323 = vld [vmem:[#allocation5 + $0x48] sm:$0xff]
        %v324 = vld [vmem:[#allocation5 + $0x50] sm:$0xff]
        %v325 = vld [vmem:[#allocation5 + $0x58] sm:$0xff]
        %v326 = vld [vmem:[#allocation5 + $0x60] sm:$0xff]
        %v327 = vld [vmem:[#allocation5 + $0x68] sm:$0xff]
        %vm328 = vcmask 457728
        %v330 = vsel %vm328, %v310, 0
        %v333 = vsel %vm328, %v311, 0
        %v336 = vsel %vm328, %v312, 0
        %v339 = vsel %vm328, %v313, 0
        %341 = vmatprep.subr.mxu0 %v315
        %342 = vmatpush1.msra.mxu0 %v314
        %343 = vmatprep.subr.mxu0 %v317
        %344 = vmatpush1.msra.mxu0 %v316
        %345 = vmatprep.subr.mxu0 %v319
        %346 = vmatpush1.msra.mxu0 %v318
        %347 = vmatprep.subr.mxu0 %v321
        %348 = vmatpush1.msra.mxu0 %v320
        %349 = vmatprep.subr.mxu0 %v323
        %350 = vmatpush1.msra.mxu0 %v322
        %351 = vmatprep.subr.mxu0 %v325
        %352 = vmatpush1.msra.mxu0 %v324
        %353 = vmatprep.subr.mxu0 %v327
        %354 = vmatpush1.msra.mxu0 %v326
        %355 = vmatprep.subr.mxu0 0.0
        %356 = vmatpush1.msra.mxu0 0.0
        %357 = vmatprep.subr.mxu0 0.0
        %358 = vmatpush1.msra.mxu0 0.0
        %359 = vmatprep.subr.mxu0 0.0
        %360 = vmatpush1.msra.mxu0 0.0
        %361 = vmatprep.subr.mxu0 0.0
        %362 = vmatpush1.msra.mxu0 0.0
        %363 = vmatprep.subr.mxu0 0.0
        %364 = vmatpush1.msra.mxu0 0.0
        %365 = vmatprep.subr.mxu0 0.0
        %366 = vmatpush1.msra.mxu0 0.0
        %367 = vmatprep.subr.mxu0 0.0
        %368 = vmatpush1.msra.mxu0 0.0
        %369 = vmatprep.subr.mxu0 0.0
        %370 = vmatpush1.msra.mxu0 0.0
        %371 = vmatprep.subr.mxu0 0.0
        %372 = vmatpush1.msra.mxu0 0.0
        %373 = vmatprep.subr.mxu0 0.0
        %374 = vmatpush1.msra.mxu0 0.0
        %375 = vmatprep.subr.mxu0 0.0
        %376 = vmatpush1.msra.mxu0 0.0
        %377 = vmatprep.subr.mxu0 0.0
        %378 = vmatpush1.msra.mxu0 0.0
        %379 = vmatprep.subr.mxu0 0.0
        %380 = vmatpush1.msra.mxu0 0.0
        %381 = vmatprep.subr.mxu0 0.0
        %382 = vmatpush1.msra.mxu0 0.0
        %383 = vmatprep.subr.mxu0 0.0
        %384 = vmatpush1.msra.mxu0 0.0
        %385 = vmatprep.subr.mxu0 0.0
        %386 = vmatpush1.msra.mxu0 0.0
        %387 = vmatprep.subr.mxu0 0.0
        %388 = vmatpush1.msra.mxu0 0.0
        %389 = vmatprep.subr.mxu0 0.0
        %390 = vmatpush1.msra.mxu0 0.0
        %391 = vmatprep.subr.mxu0 0.0
        %392 = vmatpush1.msra.mxu0 0.0
        %393 = vmatprep.subr.mxu0 0.0
        %394 = vmatpush1.msra.mxu0 0.0
        %395 = vmatprep.subr.mxu0 0.0
        %396 = vmatpush1.msra.mxu0 0.0
        %397 = vmatprep.subr.mxu0 0.0
        %398 = vmatpush1.msra.mxu0 0.0
        %399 = vmatprep.subr.mxu0 0.0
        %400 = vmatpush1.msra.mxu0 0.0
        %401 = vmatprep.subr.mxu0 0.0
        %402 = vmatpush1.msra.mxu0 0.0
        %403 = vmatprep.subr.mxu0 0.0
        %404 = vmatpush1.msra.mxu0 0.0
        %405 = vmatprep.mubr.f32.mxu0 0.0
        %406 = vmatmul.mubr.f32.gmra.mrb[0].mxu0 %v330
        %v407 = vpop.f32.mrb[0].mxu0
        %v408 = vadd.f32 0.0, %v407
        %v409 = vpop.f32.mrb[0].mxu0
        %v410 = vadd.f32 0.0, %v409
        %411 = vmatprep.mubr.f32.mxu0 0.0
        %412 = vmatmul.mubr.f32.gmra.mrb[0].mxu0 %v333
        %v413 = vpop.f32.mrb[0].mxu0
        %v414 = vadd.f32 0.0, %v413
        %v415 = vpop.f32.mrb[0].mxu0
        %v416 = vadd.f32 0.0, %v415
        %417 = vmatprep.mubr.f32.mxu0 0.0
        %418 = vmatmul.mubr.f32.gmra.mrb[0].mxu0 %v336
        %v419 = vpop.f32.mrb[0].mxu0
        %v420 = vadd.f32 0.0, %v419
        %v421 = vpop.f32.mrb[0].mxu0
        %v422 = vadd.f32 0.0, %v421
        %423 = vmatprep.mubr.f32.mxu0 0.0
        %424 = vmatmul.mubr.f32.gmra.mrb[0].mxu0 %v339
        %v425 = vpop.f32.mrb[0].mxu0
        %v426 = vadd.f32 0.0, %v425
        %v427 = vpop.f32.mrb[0].mxu0
        %v428 = vadd.f32 0.0, %v427
        %429 = vdwg.mxu0
        %v431 = vcombine.high %v305, %v305
        %vm432 = vcmask 31744
        %v434 = vsel %vm432, %v306, 0
        %v437 = vsel %vm432, %v307, 0
        %v440 = vsel %vm432, %v308, 0
        %v443 = vsel %vm432, %v309, 0
        %vm445 = vcmask 1043456
        %v446 = vsel %vm445, %v305, 0
        %v448 = vsel %vm445, %v431, 0
        %450 = vmatprep.subr.mxu0 %v448
        %451 = vmatpush1.msra.mxu0 %v446
        %452 = vmatprep.subr.mxu0 0.0
        %453 = vmatpush1.msra.mxu0 0.0
        %454 = vmatprep.subr.mxu0 0.0
        %455 = vmatpush1.msra.mxu0 0.0
        %456 = vmatprep.subr.mxu0 0.0
        %457 = vmatpush1.msra.mxu0 0.0
        %458 = vmatprep.subr.mxu0 0.0
        %459 = vmatpush1.msra.mxu0 0.0
        %460 = vmatprep.subr.mxu0 0.0
        %461 = vmatpush1.msra.mxu0 0.0
        %462 = vmatprep.subr.mxu0 0.0
        %463 = vmatpush1.msra.mxu0 0.0
        %464 = vmatprep.subr.mxu0 0.0
        %465 = vmatpush1.msra.mxu0 0.0
        %466 = vmatprep.subr.mxu0 0.0
        %467 = vmatpush1.msra.mxu0 0.0
        %468 = vmatprep.subr.mxu0 0.0
        %469 = vmatpush1.msra.mxu0 0.0
        %470 = vmatprep.subr.mxu0 0.0
        %471 = vmatpush1.msra.mxu0 0.0
        %472 = vmatprep.subr.mxu0 0.0
        %473 = vmatpush1.msra.mxu0 0.0
        %474 = vmatprep.subr.mxu0 0.0
        %475 = vmatpush1.msra.mxu0 0.0
        %476 = vmatprep.subr.mxu0 0.0
        %477 = vmatpush1.msra.mxu0 0.0
        %478 = vmatprep.subr.mxu0 0.0
        %479 = vmatpush1.msra.mxu0 0.0
        %480 = vmatprep.subr.mxu0 0.0
        %481 = vmatpush1.msra.mxu0 0.0
        %482 = vmatprep.subr.mxu0 0.0
        %483 = vmatpush1.msra.mxu0 0.0
        %484 = vmatprep.subr.mxu0 0.0
        %485 = vmatpush1.msra.mxu0 0.0
        %486 = vmatprep.subr.mxu0 0.0
        %487 = vmatpush1.msra.mxu0 0.0
        %488 = vmatprep.subr.mxu0 0.0
        %489 = vmatpush1.msra.mxu0 0.0
        %490 = vmatprep.subr.mxu0 0.0
        %491 = vmatpush1.msra.mxu0 0.0
        %492 = vmatprep.subr.mxu0 0.0
        %493 = vmatpush1.msra.mxu0 0.0
        %494 = vmatprep.subr.mxu0 0.0
        %495 = vmatpush1.msra.mxu0 0.0
        %496 = vmatprep.subr.mxu0 0.0
        %497 = vmatpush1.msra.mxu0 0.0
        %498 = vmatprep.subr.mxu0 0.0
        %499 = vmatpush1.msra.mxu0 0.0
        %500 = vmatprep.subr.mxu0 0.0
        %501 = vmatpush1.msra.mxu0 0.0
        %502 = vmatprep.subr.mxu0 0.0
        %503 = vmatpush1.msra.mxu0 0.0
        %504 = vmatprep.subr.mxu0 0.0
        %505 = vmatpush1.msra.mxu0 0.0
        %506 = vmatprep.subr.mxu0 0.0
        %507 = vmatpush1.msra.mxu0 0.0
        %508 = vmatprep.subr.mxu0 0.0
        %509 = vmatpush1.msra.mxu0 0.0
        %510 = vmatprep.subr.mxu0 0.0
        %511 = vmatpush1.msra.mxu0 0.0
        %512 = vmatprep.subr.mxu0 0.0
        %513 = vmatpush1.msra.mxu0 0.0
        %514 = vmatprep.mubr.f32.mxu0 0.0
        %515 = vmatmul.mubr.f32.gmra.mrb[0].mxu0 %v434
        %v516 = vpop.f32.mrb[0].mxu0
        %v517 = vadd.f32 %v408, %v516
        %v518 = vpop.f32.mrb[0].mxu0
        %v519 = vadd.f32 %v410, %v518
        %520 = vmatprep.mubr.f32.mxu0 0.0
        %521 = vmatmul.mubr.f32.gmra.mrb[0].mxu0 %v437
        %v522 = vpop.f32.mrb[0].mxu0
        %v523 = vadd.f32 %v414, %v522
        %v524 = vpop.f32.mrb[0].mxu0
        %v525 = vadd.f32 %v416, %v524
        %526 = vmatprep.mubr.f32.mxu0 0.0
        %527 = vmatmul.mubr.f32.gmra.mrb[0].mxu0 %v440
        %v528 = vpop.f32.mrb[0].mxu0
        %v529 = vadd.f32 %v420, %v528
        %v530 = vpop.f32.mrb[0].mxu0
        %v531 = vadd.f32 %v422, %v530
        %532 = vmatprep.mubr.f32.mxu0 0.0
        %533 = vmatmul.mubr.f32.gmra.mrb[0].mxu0 %v443
        %v534 = vpop.f32.mrb[0].mxu0
        %v535 = vadd.f32 %v426, %v534
        %v536 = vpop.f32.mrb[0].mxu0
        %v537 = vadd.f32 %v428, %v536
        %538 = vdwg.mxu0
        %v539 = vld [vmem:[%s4] sm:$0xff]
        %v540 = vld [vmem:[%s4 + $0x8] sm:$0xff]
        %v541 = vld [vmem:[%s4 + $0x10] sm:$0xff]
        %v542 = vld [vmem:[%s4 + $0x18] sm:$0xff]
        %544 = vset.pattern.permute.xlu0 0
        %545 = vperm.xlu0 %544, %v539
        %v546 = vpop.permute.xlu0 %545
        %549 = vset.pattern.permute.xlu0 0
        %550 = vperm.xlu0 %549, %v540
        %v551 = vpop.permute.xlu0 %550
        %554 = vset.pattern.permute.xlu0 0
        %555 = vperm.xlu0 %554, %v541
        %v556 = vpop.permute.xlu0 %555
        %559 = vset.pattern.permute.xlu0 0
        %560 = vperm.xlu0 %559, %v542
        %v561 = vpop.permute.xlu0 %560
        %v563 = vadd.f32 %v517, %v546
        %v564 = vadd.f32 %v519, %v546
        %v565 = vadd.f32 %v523, %v551
        %v566 = vadd.f32 %v525, %v551
        %v567 = vadd.f32 %v529, %v556
        %v568 = vadd.f32 %v531, %v556
        %v569 = vadd.f32 %v535, %v561
        %v570 = vadd.f32 %v537, %v561
        %v571 = vmax.f32 %v563, 0.0
        %v572 = vmax.f32 %v564, 0.0
        %v573 = vmax.f32 %v565, 0.0
        %v574 = vmax.f32 %v566, 0.0
        %v575 = vmax.f32 %v567, 0.0
        %v576 = vmax.f32 %v568, 0.0
        %v577 = vmax.f32 %v569, 0.0
        %v578 = vmax.f32 %v570, 0.0
        %579 = vst [vmem:[%s296] sm:$0xff] %v571
        %580 = vst [vmem:[%s296 + $0x8] sm:$0xff] %v572
        %581 = vst [vmem:[%s296 + $0x10] sm:$0xff] %v573
        %582 = vst [vmem:[%s296 + $0x18] sm:$0xff] %v574
        %583 = vst [vmem:[%s296 + $0x20] sm:$0xff] %v575
        %584 = vst [vmem:[%s296 + $0x28] sm:$0xff] %v576
        %585 = vst [vmem:[%s296 + $0x30] sm:$0xff] %v577
        %586 = vst [vmem:[%s296 + $0x38] sm:$0xff] %v578
        %s587 = sand.u32 %s167, 1
        %s588 = scalar_lea.sflag [#allocation4], %s587
        %s589 = sand.u32 %s167, 1
        %s590 = smul.addr %s589, 64
        %s591 = scalar_lea.vmem [#allocation7], %s590
        // Predicated region
        $region49: #{tpu_custom_call.1} parent=39 // pred_check
          %p592 = pneg %p177
        $region50: #{tpu_custom_call.1} parent=39 // pred_check_branch
          %594 = sbr.rel (%p592) target = $region52
        $region51: #{tpu_custom_call.1} parent=39 // pred_region
          %s595 = smul.u32 2, %s27
          %s597 = ssub.s32 1024, 1024
          %598 = vsyncadd %s588, %s597
          %s599 = smul.addr %s28, 8
          %s600 = sadd.s32 %s595, %s599
          %s601 = smul.addr %s600, 128
          %s602 = scalar_lea.hbm %s5, %s601
          %s603 = sshll.u32 %s591, 4
          %s604 = int_to_ptr.vmem [resolvable:$true] %s603
          %609 = dma.vmem_to_hbm [thread:$0]  %s604, 1024, %s602, %s588, 256, 256, 16
        $region52: #{tpu_custom_call.1} parent=39 // pred_fallthru
          _
      $region40: #{tpu_custom_call.1} parent=5 // pred_fallthru
        _
      %p610 = scmp.le.s32.totalorder 2, %s18
      // Predicated region
      $region53: #{tpu_custom_call.1} parent=5 // pred_check
        %p611 = pneg %p610
      $region54: #{tpu_custom_call.1} parent=5 // pred_check_branch
        %613 = sbr.rel (%p611) target = $region56
      $region55: #{tpu_custom_call.1} parent=5 // pred_region
        %s614 = ssub.s32 %s18, 2
        // Predicated region
        $region57: #{tpu_custom_call.1} parent=55 // pred_check
          %p615 = pneg %p183
        $region58: #{tpu_custom_call.1} parent=55 // pred_check_branch
          %617 = sbr.rel (%p615) target = $region60
        $region59: #{tpu_custom_call.1} parent=55 // pred_region
          %s618 = sand.u32 %s168, 1
          %s619 = scalar_lea.sflag [#allocation4], %s618
          %s620 = sand.u32 %s168, 1
          %s621 = smul.addr %s620, 64
          %s622 = scalar_lea.vmem [#allocation7], %s621
          %623 = dma.done %s619, 1024
        $region60: #{tpu_custom_call.1} parent=55 // pred_fallthru
          _
      $region56: #{tpu_custom_call.1} parent=5 // pred_fallthru
        _
    $region6: #{tpu_custom_call.1} parent=1 // loop_footer
      %s22 = sadd.s32 1, %s18
    $region7: #{tpu_custom_call.1} parent=1 // loop_footer_branch
      %17 = sbr.rel target = $region3
    $region8: #{tpu_custom_call.1} parent=1 // loop_exit
      _
    %624 = vsyncpa [#allocation3], 1
    %s625 = scalar_lea.sflag [#allocation3], 1
    %626 = vsyncpa %s625, 1
    %627 = vsyncpa [#allocation6], 1
    %628 = vsyncpa [#allocation4], 1
    %s629 = scalar_lea.sflag [#allocation4], 1
    %630 = vsyncpa %s629, 1

</llo_original>
